<compile_context>
chip_gen: v7x
topology: tpu7x:2x2x1
jax: 0.10.0
libtpu: 0.0.40
codegen_flags: <defaults>
</compile_context>

<pallas_src>
import functools

import jax
import jax.numpy as jnp
from jax.experimental import pallas as pl
from jax.experimental.pallas import tpu as pltpu


def _infonce_lse_kernel(q_ref, k_ref, out_ref, l_ref, *,
                        tq, tk, inv_t, n_valid, n_pad):
    """Accumulate per-row sum(exp(logit - 1/t)) over key tiles; on the last key
    tile write this query tile's summed row-logsumexp into a lane-dense slab."""
    qi = pl.program_id(0)
    ki = pl.program_id(1)
    nk = pl.num_programs(1)

    inv_t_f = jnp.float32(inv_t)
    has_pad = n_pad != n_valid          # static Python bool (compile-time)

    @pl.when(ki == 0)
    def _init():
        l_ref[...] = jnp.zeros((tq, 1), jnp.float32)

    # (tq, tk) temperature-scaled cosine logits (both operands carry sqrt(1/t)):
    # bf16 MXU matmul with f32 accumulation.
    logits = jax.lax.dot_general(
        q_ref[...], k_ref[...], (((1,), (1,)), ((), ())),
        preferred_element_type=jnp.float32)

    # Fixed-shift exp: logits <= 1/t (cosine <= 1), so exp(logits - 1/t) cannot
    # overflow and no running max is needed (temperature guard in the wrapper).
    p = jnp.exp(logits - inv_t_f)

    q_start = qi * tq
    k_start = ki * tk

    if has_pad:
        # Zero contributions from zero-padded key rows (emitted only when the
        # row dimension was actually padded).
        col_ids = k_start + jax.lax.broadcasted_iota(jnp.int32, (1, tk), 1)
        p = jnp.where(col_ids < n_valid, p, 0.0)

    crosses_diag = jnp.logical_and(q_start < k_start + tk,
                                   k_start < q_start + tq)

    @pl.when(crosses_diag)
    def _masked():
        # global row == global col  <=>  i - j == k_start - q_start
        diff = (jax.lax.broadcasted_iota(jnp.int32, (tq, 1), 0)
                - jax.lax.broadcasted_iota(jnp.int32, (1, tk), 1))
        pm = jnp.where(diff == (k_start - q_start), 0.0, p)
        l_ref[...] += jnp.sum(pm, axis=1, keepdims=True)

    @pl.when(jnp.logical_not(crosses_diag))
    def _unmasked():
        l_ref[...] += jnp.sum(p, axis=1, keepdims=True)

    @pl.when(ki == nk - 1)
    def _finalize():
        lse_rows = jnp.log(l_ref[...]) + inv_t_f          # (tq, 1) row logsumexp
        if has_pad:
            row_ids = q_start + jax.lax.broadcasted_iota(jnp.int32, (tq, 1), 0)
            lse_rows = jnp.where(row_ids < n_valid, lse_rows, 0.0)
        lse_sum = jnp.sum(lse_rows)

        sub = jax.lax.broadcasted_iota(jnp.int32, (1, 8, 128), 1)
        lane = jax.lax.broadcasted_iota(jnp.int32, (1, 8, 128), 2)
        out_ref[...] = jnp.where(jnp.logical_and(sub == 0, lane == 0), lse_sum,
                                 jnp.zeros((1, 8, 128), jnp.float32))


def _round_up(x, m):
    return -(-x // m) * m


def _largest_div8_divisor(m, cap):
    """Largest multiple of 8 that divides m (m % 8 == 0) and is <= cap."""
    d = max(8, (min(cap, m) // 8) * 8)
    while d > 8 and m % d != 0:
        d -= 8
    return d


def _est_vmem_bytes(tq, tk, dp):
    """Conservative per-step working set: double-buffered bf16 q/k streams,
    (tq, tk) f32 temporaries (matmul result / exp / masked copy), lane-padded
    running-sum scratch and the output block."""
    return (2 * tq * dp * 2 + 2 * tk * dp * 2
            + 3 * tq * tk * 4
            + tq * 128 * 4
            + 2 * 8 * 128 * 4)


def _pick_tiles(n, dp, q_tile, k_tile):
    """Row-tile sizes (tq, tk) and padded row count n_pad. Both tiles are
    multiples of 8 and divide n_pad; padding waste and VMEM use are bounded."""
    n8 = _round_up(n, 8)
    tq = max(8, min((q_tile // 8) * 8, n8))
    # Bound zero-padding waste along the rows to <= ~1/8 of the data.
    while tq > 8 and (_round_up(n8, tq) - n8) * 8 > n8:
        tq = max(8, (tq // 2 // 8) * 8)
    n_pad = _round_up(n8, tq)
    # v7x megacore: keep at least two query tiles when there is enough data.
    if n_pad // tq < 2 and n_pad >= 16:
        tq = _largest_div8_divisor(n_pad, n_pad // 2)
    tk = _largest_div8_divisor(n_pad, max(8, (k_tile // 8) * 8))
    # Fit the working set into a VMEM budget portable across v5e/v6e/v7x.
    budget = 44 * 1024 * 1024
    while _est_vmem_bytes(tq, tk, dp) > budget and (tq > 8 or tk > 8):
        if tk >= tq and tk > 8:
            tk = _largest_div8_divisor(n_pad, tk // 2)
        else:
            tq = _largest_div8_divisor(n_pad, tq // 2)
    return tq, tk, n_pad


@functools.partial(jax.jit, static_argnames=(
    "temperature", "reg_coef", "reg_radius", "q_tile", "k_tile"))
def infonce_cosine(features, *, temperature=0.5, reg_coef=0.0,
                   reg_radius=200.0, q_tile=1024, k_tile=2048):
    """Pallas InfoNCECosine forward. `features`: (2*B, D) float array."""
    n, d = features.shape
    if n % 2 or n < 4:
        raise ValueError("features must stack two augmented views (>=2 each) on dim 0")
    if temperature < 0.03:
        # TODO(synk): reinstate an online running-max logsumexp for extreme
        # temperatures (the fixed 1/t shift underflows f32 once 2/t >~ 80).
        raise ValueError("temperature too small for the fixed-shift logsumexp path")
    batch = n // 2

    # ---- O(n*d) terms in plain XLA (f32): norms, penalty, alignment ----------
    x = features.astype(jnp.float32)
    sq = jnp.sum(x * x, axis=1)
    penalty = jnp.float32(reg_coef) * jnp.mean(
        (jnp.sqrt(sq) - jnp.float32(reg_radius)) ** 2)
    inv_norm = jax.lax.rsqrt(jnp.maximum(sq, 1e-24))     # == F.normalize eps 1e-12
    xn = x * inv_norm[:, None]
    align = jnp.sum(xn[:batch] * xn[batch:])             # == trace(a_n @ b_n.T)
    tempered_alignment = align / jnp.float32(float(temperature) * batch)

    # ---- kernel operand: normalised, sqrt(1/t)-scaled bf16, zero-padded ------
    # TODO(synk): tile the feature (contraction) dimension for extremely large d.
    dp = _round_up(d, 128)                               # lane / MXU width
    tq, tk, n_pad = _pick_tiles(n, dp, q_tile, k_tile)
    num_q, num_k = n_pad // tq, n_pad // tk

    xs = (xn * jnp.float32(float(temperature) ** -0.5)).astype(jnp.bfloat16)
    xs = jnp.pad(xs, ((0, n_pad - n), (0, dp - d)))

    kernel = functools.partial(
        _infonce_lse_kernel, tq=tq, tk=tk,
        inv_t=1.0 / float(temperature), n_valid=n, n_pad=n_pad)

    vmem_limit = int(min(60 * 1024 * 1024,
                         max(32 * 1024 * 1024,
                             _est_vmem_bytes(tq, tk, dp) + (4 << 20))))

    partials = pl.pallas_call(
        kernel,
        out_shape=jax.ShapeDtypeStruct((num_q, 8, 128), jnp.float32),
        grid=(num_q, num_k),
        in_specs=[
            pl.BlockSpec((tq, dp), lambda qi, ki: (qi, 0)),   # query rows (bf16)
            pl.BlockSpec((tk, dp), lambda qi, ki: (ki, 0)),   # key rows (bf16)
        ],
        out_specs=pl.BlockSpec((1, 8, 128), lambda qi, ki: (qi, 0, 0)),
        scratch_shapes=[pltpu.VMEM((tq, 1), jnp.float32)],    # running exp-sum
        compiler_params=pltpu.CompilerParams(
            dimension_semantics=("parallel", "arbitrary"),
            vmem_limit_bytes=vmem_limit),
    )(xs, xs)

    lse_total = jnp.sum(partials[:, 0, 0])      # sum of all 2B masked row-LSEs
    raw_uniformity = lse_total / batch
    loss = -(tempered_alignment - raw_uniformity * 0.5) + penalty
    return dict(loss=loss, ta=-tempered_alignment, ru=raw_uniformity * 0.5)


def infonce_cosine_ref(features, *, temperature, reg_coef, reg_radius):
    """Pure-JAX f32 reference mirroring the PyTorch module, for verification."""
    n = features.shape[0]
    B = n // 2
    a, b = features[:B], features[B:]
    vecnorms = jnp.linalg.norm(features, axis=1)
    penalty = reg_coef * jnp.mean((vecnorms - reg_radius) ** 2)
    an = a / jnp.maximum(jnp.linalg.norm(a, axis=1, keepdims=True), 1e-12)
    bn = b / jnp.maximum(jnp.linalg.norm(b, axis=1, keepdims=True), 1e-12)
    cos_aa = an @ an.T / temperature
    cos_bb = bn @ bn.T / temperature
    cos_ab = an @ bn.T / temperature
    ta = jnp.trace(cos_ab) / B
    eye = jnp.eye(B, dtype=bool)
    cos_aa = jnp.where(eye, -jnp.inf, cos_aa)
    cos_bb = jnp.where(eye, -jnp.inf, cos_bb)
    lse1 = jax.nn.logsumexp(jnp.concatenate([cos_ab.T, cos_bb], axis=1), axis=1).mean()
    lse2 = jax.nn.logsumexp(jnp.concatenate([cos_aa, cos_ab], axis=1), axis=1).mean()
    ru = lse1 + lse2
    loss = -(ta - ru / 2) + penalty
    return dict(loss=loss, ta=-ta, ru=ru / 2)


if __name__ == "__main__":
    k1, k2 = jax.random.split(jax.random.PRNGKey(0))
    params = dict(temperature=0.5, reg_coef=0.01, reg_radius=200.0)

    # 2*B = 16 samples (two views of B=8), D = 32 (padded to 128 lanes inside).
    feats = jax.random.normal(k1, (16, 32), dtype=jnp.float32)
    out = infonce_cosine(feats, **params)
    jax.block_until_ready(out)
    ref = infonce_cosine_ref(feats, **params)
    for key in ("loss", "ta", "ru"):
        assert jnp.allclose(out[key], ref[key], rtol=1e-2, atol=1e-2), (
            key, float(out[key]), float(ref[key]))

    # Awkward size (2*B = 20 -> rows zero-padded to 24) exercising the
    # pad-and-mask path.
    feats2 = jax.random.normal(k2, (20, 40), dtype=jnp.float32)
    out2 = infonce_cosine(feats2, **params)
    jax.block_until_ready(out2)
    ref2 = infonce_cosine_ref(feats2, **params)
    for key in ("loss", "ta", "ru"):
        assert jnp.allclose(out2[key], ref2[key], rtol=1e-2, atol=1e-2), (
            key, float(out2[key]), float(ref2[key]))

    print("KERNEL_OK")
</pallas_src>

<mosaic_0001>
module attributes {stable_mosaic.version = 11 : i64} {
  func.func @_infonce_lse_kernel(%arg0: i32, %arg1: i32, %arg2: memref<8x128xbf16, #tpu.memory_space<vmem>>, %arg3: memref<16x128xbf16, #tpu.memory_space<vmem>>, %arg4: memref<1x8x128xf32, #tpu.memory_space<vmem>>, %arg5: memref<8x1xf32, #tpu.memory_space<vmem>>) attributes {dimension_semantics = [#tpu.dimension_semantics<parallel>, #tpu.dimension_semantics<arbitrary>], iteration_bounds = array<i64: 2, 1>, scalar_prefetch = 0 : i64, scratch_operands = 1 : i64, tpu.core_type = #tpu.core_type<tc>, window_params = [{transform_indices = @transform_0, window_bounds = array<i64: 8, 128>}, {transform_indices = @transform_1, window_bounds = array<i64: 16, 128>}, {transform_indices = @transform_2, window_bounds = array<i64: 1, 8, 128>}]} {
    %c0_i32 = arith.constant 0 : i32
    %0 = arith.cmpi eq, %arg1, %c0_i32 : i32
    %1 = arith.extui %0 : i1 to i32
    %c0_i32_0 = arith.constant 0 : i32
    %2 = arith.cmpi ne, %1, %c0_i32_0 : i32
    scf.if %2 {
      %cst_12 = arith.constant 0.000000e+00 : f32
      %24 = vector.broadcast %cst_12 : f32 to vector<8x1xf32>
      %c0_13 = arith.constant 0 : index
      %c0_14 = arith.constant 0 : index
      %25 = vector.load %arg5[%c0_13, %c0_14] : memref<8x1xf32, #tpu.memory_space<vmem>>, vector<8x1xf32>
      tpu.vector_store %arg5[%c0_13, %c0_14], %24 {strides = array<i32>} : memref<8x1xf32, #tpu.memory_space<vmem>>, vector<8x1xf32>,
    } else {
    }
    %c0 = arith.constant 0 : index
    %c0_1 = arith.constant 0 : index
    %3 = vector.load %arg2[%c0, %c0_1] : memref<8x128xbf16, #tpu.memory_space<vmem>>, vector<8x128xbf16>
    %c0_2 = arith.constant 0 : index
    %c0_3 = arith.constant 0 : index
    %4 = vector.load %arg3[%c0_2, %c0_3] : memref<16x128xbf16, #tpu.memory_space<vmem>>, vector<16x128xbf16>
    %cst = arith.constant dense<0.000000e+00> : vector<8x16xf32>
    %5 = tpu.matmul %3, %4, %cst {dimension_numbers = #tpu.dot_dimension_numbers<[1], [1], [0], [0], [0, 0, 1, 0], [], []>} : vector<8x128xbf16>, vector<16x128xbf16>, vector<8x16xf32> -> vector<8x16xf32>
    %cst_4 = arith.constant 2.000000e+00 : f32
    %6 = vector.broadcast %cst_4 : f32 to vector<8x16xf32>
    %7 = arith.subf %5, %6 : vector<8x16xf32>
    %8 = math.exp %7 : vector<8x16xf32>
    %c8_i32 = arith.constant 8 : i32
    %9 = arith.muli %arg0, %c8_i32 : i32
    %c16_i32 = arith.constant 16 : i32
    %10 = arith.muli %arg1, %c16_i32 : i32
    %c16_i32_5 = arith.constant 16 : i32
    %11 = arith.addi %10, %c16_i32_5 : i32
    %12 = arith.cmpi slt, %9, %11 : i32
    %c8_i32_6 = arith.constant 8 : i32
    %13 = arith.addi %9, %c8_i32_6 : i32
    %14 = arith.cmpi slt, %10, %13 : i32
    %15 = arith.andi %12, %14 : i1
    %16 = arith.extui %15 : i1 to i32
    %c0_i32_7 = arith.constant 0 : i32
    %17 = arith.cmpi ne, %16, %c0_i32_7 : i32
    scf.if %17 {
      %24 = tpu.iota {dimensions = array<i32: 0>} : vector<8x1xi32>
      %25 = tpu.iota {dimensions = array<i32: 1>} : vector<1x16xi32>
      %26 = vector.broadcast %24 : vector<8x1xi32> to vector<8x16xi32>
      %27 = vector.broadcast %25 : vector<1x16xi32> to vector<8x16xi32>
      %28 = arith.subi %26, %27 : vector<8x16xi32>
      %29 = arith.subi %10, %9 : i32
      %30 = vector.broadcast %29 : i32 to vector<8x16xi32>
      %31 = arith.cmpi eq, %28, %30 : vector<8x16xi32>
      %cst_12 = arith.constant 0.000000e+00 : f32
      %32 = vector.broadcast %cst_12 : f32 to vector<8x16xf32>
      %33 = arith.select %31, %32, %8 : vector<8x16xi1>, vector<8x16xf32>
      %c0_13 = arith.constant 0 : index
      %c0_14 = arith.constant 0 : index
      %34 = vector.load %arg5[%c0_13, %c0_14] : memref<8x1xf32, #tpu.memory_space<vmem>>, vector<8x1xf32>
      %cst_15 = arith.constant dense<0.000000e+00> : vector<8xf32>
      %35 = vector.multi_reduction <add>, %33, %cst_15 [1] : vector<8x16xf32> to vector<8xf32>
      %36 = vector.shape_cast %35 : vector<8xf32> to vector<8x1xf32>
      %37 = arith.addf %34, %36 : vector<8x1xf32>
      %c0_16 = arith.constant 0 : index
      %c0_17 = arith.constant 0 : index
      %38 = vector.load %arg5[%c0_16, %c0_17] : memref<8x1xf32, #tpu.memory_space<vmem>>, vector<8x1xf32>
      tpu.vector_store %arg5[%c0_16, %c0_17], %37 {strides = array<i32>} : memref<8x1xf32, #tpu.memory_space<vmem>>, vector<8x1xf32>,
    } else {
    }
    %true = arith.constant true
    %18 = arith.xori %15, %true : i1
    %19 = arith.extui %18 : i1 to i32
    %c0_i32_8 = arith.constant 0 : i32
    %20 = arith.cmpi ne, %19, %c0_i32_8 : i32
    scf.if %20 {
      %c0_12 = arith.constant 0 : index
      %c0_13 = arith.constant 0 : index
      %24 = vector.load %arg5[%c0_12, %c0_13] : memref<8x1xf32, #tpu.memory_space<vmem>>, vector<8x1xf32>
      %cst_14 = arith.constant dense<0.000000e+00> : vector<8xf32>
      %25 = vector.multi_reduction <add>, %8, %cst_14 [1] : vector<8x16xf32> to vector<8xf32>
      %26 = vector.shape_cast %25 : vector<8xf32> to vector<8x1xf32>
      %27 = arith.addf %24, %26 : vector<8x1xf32>
      %c0_15 = arith.constant 0 : index
      %c0_16 = arith.constant 0 : index
      %28 = vector.load %arg5[%c0_15, %c0_16] : memref<8x1xf32, #tpu.memory_space<vmem>>, vector<8x1xf32>
      tpu.vector_store %arg5[%c0_15, %c0_16], %27 {strides = array<i32>} : memref<8x1xf32, #tpu.memory_space<vmem>>, vector<8x1xf32>,
    } else {
    }
    %c0_i32_9 = arith.constant 0 : i32
    %21 = arith.cmpi eq, %arg1, %c0_i32_9 : i32
    %22 = arith.extui %21 : i1 to i32
    %cst_10 = arith.constant 2.000000e+00 : f32
    %c0_i32_11 = arith.constant 0 : i32
    %23 = arith.cmpi ne, %22, %c0_i32_11 : i32
    scf.if %23 {
      %c0_12 = arith.constant 0 : index
      %c0_13 = arith.constant 0 : index
      %24 = vector.load %arg5[%c0_12, %c0_13] : memref<8x1xf32, #tpu.memory_space<vmem>>, vector<8x1xf32>
      %25 = math.log %24 : vector<8x1xf32>
      %26 = vector.broadcast %cst_10 : f32 to vector<8x1xf32>
      %27 = arith.addf %25, %26 : vector<8x1xf32>
      %28 = vector.shape_cast %27 : vector<8x1xf32> to vector<1x8x1xf32>
      %cst_14 = arith.constant dense<0.000000e+00> : vector<1xf32>
      %29 = vector.multi_reduction <add>, %28, %cst_14 [1, 2] : vector<1x8x1xf32> to vector<1xf32>
      %30 = vector.shape_cast %29 : vector<1xf32> to vector<1x1x1xf32>
      %31 = vector.extract %30[0, 0, 0] : f32 from vector<1x1x1xf32>
      %32 = tpu.iota {dimensions = array<i32: 1>} : vector<1x8x128xi32>
      %33 = tpu.iota {dimensions = array<i32: 2>} : vector<1x8x128xi32>
      %c0_i32_15 = arith.constant 0 : i32
      %34 = vector.broadcast %c0_i32_15 : i32 to vector<1x8x128xi32>
      %35 = arith.cmpi eq, %32, %34 : vector<1x8x128xi32>
      %c0_i32_16 = arith.constant 0 : i32
      %36 = vector.broadcast %c0_i32_16 : i32 to vector<1x8x128xi32>
      %37 = arith.cmpi eq, %33, %36 : vector<1x8x128xi32>
      %38 = arith.andi %35, %37 : vector<1x8x128xi1>
      %cst_17 = arith.constant 0.000000e+00 : f32
      %39 = vector.broadcast %cst_17 : f32 to vector<1x8x128xf32>
      %40 = vector.broadcast %31 : f32 to vector<1x8x128xf32>
      %41 = arith.select %38, %40, %39 : vector<1x8x128xi1>, vector<1x8x128xf32>
      %c0_18 = arith.constant 0 : index
      %c0_19 = arith.constant 0 : index
      %c0_20 = arith.constant 0 : index
      %42 = vector.load %arg4[%c0_18, %c0_19, %c0_20] : memref<1x8x128xf32, #tpu.memory_space<vmem>>, vector<1x8x128xf32>
      tpu.vector_store %arg4[%c0_18, %c0_19, %c0_20], %41 {strides = array<i32>} : memref<1x8x128xf32, #tpu.memory_space<vmem>>, vector<1x8x128xf32>,
    } else {
    }
    return
  }
  func.func @transform_0(%arg0: i32, %arg1: i32) -> (i32, i32) {
    %c0_i32 = arith.constant 0 : i32
    %c0_i32_0 = arith.constant 0 : i32
    return %arg0, %c0_i32 : i32, i32
  }
  func.func @transform_1(%arg0: i32, %arg1: i32) -> (i32, i32) {
    %c0_i32 = arith.constant 0 : i32
    %c0_i32_0 = arith.constant 0 : i32
    return %arg1, %c0_i32 : i32, i32
  }
  func.func @transform_2(%arg0: i32, %arg1: i32) -> (i32, i32, i32) {
    %c0_i32 = arith.constant 0 : i32
    %c0_i32_0 = arith.constant 0 : i32
    %c0_i32_1 = arith.constant 0 : i32
    return %arg0, %c0_i32, %c0_i32_0 : i32, i32, i32
  }
}

</mosaic_0001>

<llo_original>
// kernel: infonce_cosine.1
$region0: #{infonce_cosine.1}
  #allocation0 [shape = 'u32[]', space=smem, size = 0x4, offset = 0x4, fixed_abs, tag = 'smem constant byte address 0x4 - core index']
  #allocation1 [shape = 'u32[144,128]{1,0:T(1,128)}', space=vmem, size = 0x12000, scoped, tag = 'internal scratch']
  #allocation2 [shape = 'f32[8,1]{1,0:T(8,128)}', space=vmem, size = 0x1000, scoped, tag = 'scratch operand']
  %s0 = inlined_call_operand.vmem [shape: bf16[16,128], index: 0, kind: input, shape index: {}, may-alias: {0,1}]
  %s1 = inlined_call_operand.vmem [shape: bf16[16,128], index: 1, kind: input, shape index: {}, may-alias: {0,1}]
  %s2 = inlined_call_operand.vmem [shape: f32[2,8,128], index: 2, kind: output, shape index: {}]
  %s3 = sld [smem:[#allocation0]]
  $region57: #{infonce_cosine.1} parent=0
    _
  %s5 = ssub.s32 1, %s3
  %s6 = scalar_select 0, %s5, %s3
  loop: start=0, step=1, limit=4
  $region2: #{infonce_cosine.1} parent=0 // loop_pre_header
    _
  $region3: #{infonce_cosine.1} parent=0 // loop_header
    %s8 = sphi 0, %s12
    %p9 = scmp.ge.s32.totalorder %s8, 4
    %s15 = sphi 0, %s27
    %s16 = sphi 0, %s23
    %s17 = sphi 0, %s15
    %s18 = sphi 0, %s16
    %s19 = sphi 0, %s17
    %s20 = sphi 0, %s18
    %s30 = sphi 0, %s32
    %s33 = sphi 0, %s30
    %s34 = sphi 0, %s33
    %s50 = sphi 0, %s34
    %s56 = sphi 0, %s58
    %s59 = sphi 0, %s56
    %s60 = sphi 0, %s59
    %s76 = sphi 0, %s60
    %s82 = sphi 0, %s84
    %s85 = sphi 0, %s82
    %s86 = sphi 0, %s85
    %s102 = sphi 0, %s86
  $region4: #{infonce_cosine.1} parent=0 // loop_header_branch
    %11 = sbr.rel (%p9) target = $region8
  $region5: #{infonce_cosine.1} parent=0 // loop_body
    %s13 = ssub.s32 %s8, 1
    %s14 = ssub.s32 %s8, 2
    %s21 = sadd.s32 1, %s16
    %p22 = scmp.ge.s32.totalorder %s21, 1
    %s23 = scalar_select %p22, 0, %s21
    %s24 = sadd.s32 1, %s15
    %s25 = scalar_select %p22, %s24, %s15
    %p26 = scmp.ge.s32.totalorder %s25, 2
    %s27 = scalar_select %p26, 0, %s25
    %s28 = ssub.s32 %s15, %s27
    %p29 = scmp.eq.s32.totalorder %s28, 0
    %s31 = sadd.s32 %s30, 1
    %s32 = scalar_select %p29, %s30, %s31
    %p35 = pneg %p29
    %p36 = scmp.eq.s32.totalorder %s8, 1
    %p37 = por %p35, %p36
    %p38 = scmp.ne.s32.totalorder %s30, %s33
    %p39 = scmp.eq.s32.totalorder %s8, 0
    %p40 = por %p38, %p39
    %p41 = scmp.ne.s32.totalorder %s30, %s33
    %p42 = scmp.eq.s32.totalorder %s13, 1
    %p43 = por %p41, %p42
    %p44 = scmp.ne.s32.totalorder %s33, %s34
    %p45 = scmp.eq.s32.totalorder %s13, 0
    %p46 = por %p44, %p45
    %p47 = scmp.ne.s32.totalorder %s33, %s34
    %p48 = scmp.eq.s32.totalorder %s14, 1
    %p49 = por %p47, %p48
    %p51 = scmp.ne.s32.totalorder %s34, %s50
    %p52 = scmp.eq.s32.totalorder %s14, 0
    %p53 = por %p51, %p52
    %s54 = ssub.s32 %s16, %s23
    %p55 = scmp.eq.s32.totalorder %s54, 0
    %s57 = sadd.s32 %s56, 1
    %s58 = scalar_select %p55, %s56, %s57
    %p61 = pneg %p55
    %p62 = scmp.eq.s32.totalorder %s8, 1
    %p63 = por %p61, %p62
    %p64 = scmp.ne.s32.totalorder %s56, %s59
    %p65 = scmp.eq.s32.totalorder %s8, 0
    %p66 = por %p64, %p65
    %p67 = scmp.ne.s32.totalorder %s56, %s59
    %p68 = scmp.eq.s32.totalorder %s13, 1
    %p69 = por %p67, %p68
    %p70 = scmp.ne.s32.totalorder %s59, %s60
    %p71 = scmp.eq.s32.totalorder %s13, 0
    %p72 = por %p70, %p71
    %p73 = scmp.ne.s32.totalorder %s59, %s60
    %p74 = scmp.eq.s32.totalorder %s14, 1
    %p75 = por %p73, %p74
    %p77 = scmp.ne.s32.totalorder %s60, %s76
    %p78 = scmp.eq.s32.totalorder %s14, 0
    %p79 = por %p77, %p78
    %s80 = ssub.s32 %s15, %s27
    %p81 = scmp.eq.s32.totalorder %s80, 0
    %s83 = sadd.s32 %s82, 1
    %s84 = scalar_select %p81, %s82, %s83
    %p87 = pneg %p81
    %p88 = scmp.eq.s32.totalorder %s8, 1
    %p89 = por %p87, %p88
    %p90 = scmp.ne.s32.totalorder %s82, %s85
    %p91 = scmp.eq.s32.totalorder %s8, 0
    %p92 = por %p90, %p91
    %p93 = scmp.ne.s32.totalorder %s82, %s85
    %p94 = scmp.eq.s32.totalorder %s13, 1
    %p95 = por %p93, %p94
    %p96 = scmp.ne.s32.totalorder %s85, %s86
    %p97 = scmp.eq.s32.totalorder %s13, 0
    %p98 = por %p96, %p97
    %p99 = scmp.ne.s32.totalorder %s85, %s86
    %p100 = scmp.eq.s32.totalorder %s14, 1
    %p101 = por %p99, %p100
    %p103 = scmp.ne.s32.totalorder %s86, %s102
    %p104 = scmp.eq.s32.totalorder %s14, 0
    %p105 = por %p103, %p104
    %p106 = scmp.le.s32.totalorder 1, %s8
    %p107 = scmp.lt.s32.totalorder %s8, 3
    %p108 = pnand %p106, %p107
    %p109 = pneg %p108
    // Predicated region
    $region9: #{infonce_cosine.1} parent=5 // pred_check
      _
    $region10: #{infonce_cosine.1} parent=5 // pred_check_branch
      %111 = sbr.rel (%p108) target = $region12
    $region11: #{infonce_cosine.1} parent=5 // pred_region
      %s112 = ssub.s32 %s8, 1
      // Predicated region
      $region13: #{infonce_cosine.1} parent=11 // pred_check
        %p113 = pneg %p72
      $region14: #{infonce_cosine.1} parent=11 // pred_check_branch
        %115 = sbr.rel (%p113) target = $region16
      $region15: #{infonce_cosine.1} parent=11 // pred_region
        %s116 = smul.u32 2, %s18
        %p117 = scmp.lt.s32.totalorder %s116, 1
        %s118 = scalar_select %p117, %s116, 1
        %s119 = smul.addr %s118, 4
        %s120 = scalar_lea.vmem %s1, %s119
        %s121 = smul.u32 2, %s18
      $region16: #{infonce_cosine.1} parent=11 // pred_fallthru
        _
    $region12: #{infonce_cosine.1} parent=5 // pred_fallthru
      _
    %p122 = scmp.lt.s32.totalorder %s8, 2
    // Predicated region
    $region17: #{infonce_cosine.1} parent=5 // pred_check
      %p123 = pneg %p122
    $region18: #{infonce_cosine.1} parent=5 // pred_check_branch
      %125 = sbr.rel (%p123) target = $region20
    $region19: #{infonce_cosine.1} parent=5 // pred_region
      // Predicated region
      $region21: #{infonce_cosine.1} parent=19 // pred_check
        %p126 = pneg %p40
      $region22: #{infonce_cosine.1} parent=19 // pred_check_branch
        %128 = sbr.rel (%p126) target = $region24
      $region23: #{infonce_cosine.1} parent=19 // pred_region
        %p129 = scmp.lt.s32.totalorder %s15, 1
        %s130 = scalar_select %p129, %s15, 1
        %s131 = smul.addr %s130, 4
        %s132 = scalar_lea.vmem %s0, %s131
      $region24: #{infonce_cosine.1} parent=19 // pred_fallthru
        _
    $region20: #{infonce_cosine.1} parent=5 // pred_fallthru
      _
    %p133 = scmp.le.s32.totalorder 1, %s8
    %p134 = scmp.lt.s32.totalorder %s8, 3
    %p135 = pnand %p133, %p134
    %p136 = pneg %p135
    // Predicated region
    $region25: #{infonce_cosine.1} parent=5 // pred_check
      _
    $region26: #{infonce_cosine.1} parent=5 // pred_check_branch
      %138 = sbr.rel (%p135) target = $region28
    $region27: #{infonce_cosine.1} parent=5 // pred_region
      %s139 = ssub.s32 %s8, 1
      %p140 = scmp.lt.s32.totalorder %s17, 1
      %s141 = scalar_select %p140, %s17, 1
      %s142 = smul.addr %s141, 4
      %s143 = scalar_lea.vmem %s0, %s142
      %p144 = pneg %p46
      %p145 = pneg %p43
      %s146 = smul.u32 2, %s18
      %p147 = scmp.lt.s32.totalorder %s146, 1
      %s148 = scalar_select %p147, %s146, 1
      %s149 = smul.addr %s148, 4
      %s150 = scalar_lea.vmem %s1, %s149
      %p151 = pneg %p72
      %p152 = pneg %p69
      %p153 = pneg %p98
      %p154 = pneg %p95
      %p155 = scmp.lt.s32.totalorder %s17, 1
      %s156 = scalar_select %p155, %s17, 1
      %s157 = smul.addr %s156, 8
      %s158 = scalar_lea.vmem %s2, %s157
      %p159 = scmp.lt.s32.totalorder %s17, 1
      %s160 = scalar_select %p159, %s17, 1
      %s161 = smul.addr %s160, 4
      %s162 = scalar_lea.vmem %s0, %s161
      %s163 = smul.u32 2, %s18
      %p164 = scmp.lt.s32.totalorder %s163, 1
      %s165 = scalar_select %p164, %s163, 1
      %s166 = smul.addr %s165, 4
      %s167 = scalar_lea.vmem %s1, %s166
      %s168 = smul.u32 2, %s18
      %p169 = scmp.lt.s32.totalorder %s17, 1
      %s170 = scalar_select %p169, %s17, 1
      %s171 = smul.addr %s170, 8
      %s172 = scalar_lea.vmem %s2, %s171
      %p174 = scmp.eq.s32.totalorder %s18, 0
      // Predicated region
      $region29: #{infonce_cosine.1} parent=27 // pred_check
        %p175 = pneg %p174
      $region30: #{infonce_cosine.1} parent=27 // pred_check_branch
        %177 = sbr.rel (%p175) target = $region32
      $region31: #{infonce_cosine.1} parent=27 // pred_region
        %vm178 = vcmask 7168
        %179 = vst.msk [vmem:[#allocation2] sm:$0xff] %vm178, 0.0
      $region32: #{infonce_cosine.1} parent=27 // pred_fallthru
        _
      %v180 = vld [vmem:[%s162] sm:$0xf]
      %v181 = vld [vmem:[%s167] sm:$0xf]
      %v182 = vld [vmem:[%s167 + $0x4] sm:$0xf]
      %v185 = vunpack.c.l.b16 %v181
      %v186 = vunpack.c.l.b16 %v182
      %v187 = vpack.c.b16 %v186, %v185
      %189 = vmatprep.subr.bf16.mxu0 0
      %190 = vmatpush1.bf16.xpose.msra.mxu0 %v187
      %191 = vmatprep.subr.bf16.mxu0 0
      %192 = vmatpush1.bf16.xpose.msra.mxu0 0
      %193 = vmatprep.subr.bf16.mxu0 0
      %194 = vmatpush1.bf16.xpose.msra.mxu0 0
      %195 = vmatprep.subr.bf16.mxu0 0
      %196 = vmatpush1.bf16.xpose.msra.mxu0 0
      %197 = vmatprep.subr.bf16.mxu0 0
      %198 = vmatpush1.bf16.xpose.msra.mxu0 0
      %199 = vmatprep.subr.bf16.mxu0 0
      %200 = vmatpush1.bf16.xpose.msra.mxu0 0
      %201 = vmatprep.subr.bf16.mxu0 0
      %202 = vmatpush1.bf16.xpose.msra.mxu0 0
      %203 = vmatprep.subr.bf16.mxu0 0
      %204 = vmatpush1.bf16.xpose.msra.mxu0 0
      %205 = vmatprep.subr.bf16.mxu0 0
      %206 = vmatpush1.bf16.xpose.msra.mxu0 0
      %207 = vmatprep.subr.bf16.mxu0 0
      %208 = vmatpush1.bf16.xpose.msra.mxu0 0
      %209 = vmatprep.subr.bf16.mxu0 0
      %210 = vmatpush1.bf16.xpose.msra.mxu0 0
      %211 = vmatprep.subr.bf16.mxu0 0
      %212 = vmatpush1.bf16.xpose.msra.mxu0 0
      %213 = vmatprep.subr.bf16.mxu0 0
      %214 = vmatpush1.bf16.xpose.msra.mxu0 0
      %215 = vmatprep.subr.bf16.mxu0 0
      %216 = vmatpush1.bf16.xpose.msra.mxu0 0
      %217 = vmatprep.subr.bf16.mxu0 0
      %218 = vmatpush1.bf16.xpose.msra.mxu0 0
      %219 = vmatprep.subr.bf16.mxu0 0
      %220 = vmatpush1.bf16.xpose.msra.mxu0 0
      %221 = vmatprep.mubr.bf16.mxu0 0
      %222 = vmatmul.mubr.bf16.gmra.mrb[0].mxu0 %v180
      %v223 = vpop.f32.mrb[0].mxu0
      %v224 = vadd.f32 0.0, %v223
      %v225 = vpop.f32.mrb[0].mxu0
      %v226 = vpop.f32.mrb[0].mxu0
      %v227 = vpop.f32.mrb[0].mxu0
      %228 = vdwg.mxu0
      %v229 = vsub.f32 %v224, 2.0
      %v230 = vmul.f32 %v229, 1.442695
      %v231 = vpow.pop %v230
      %s232 = smul.u32 %s17, 8
      %s233 = smul.u32 %s18, 16
      %s234 = sadd.s32 %s233, 16
      %p235 = scmp.lt.s32.totalorder %s232, %s234
      %s236 = sadd.s32 %s232, 8
      %p237 = scmp.lt.s32.totalorder %s233, %s236
      %p238 = pnand %p235, %p237
      %p239 = pneg %p238
      // Predicated region
      $region33: #{infonce_cosine.1} parent=27 // pred_check
        _
      $region34: #{infonce_cosine.1} parent=27 // pred_check_branch
        %241 = sbr.rel (%p238) target = $region36
      $region35: #{infonce_cosine.1} parent=27 // pred_region
        %v242 = vlaneseq
        %v243 = vshrl.u32 %v242, 7
        %v244 = vlaneseq
        %v245 = vand.u32 %v244, 127
        %v246 = vsub.s32 %v243, %v245
        %s247 = ssub.s32 %s233, %s232
        %v248 = vstv %s247
        %vm249 = vcmp.eq.s32.totalorder %v246, %v248
        %v250 = vsel %vm249, 0.0, %v231
        %v251 = vld [vmem:[#allocation2] sm:$0xff]
        %vm252 = vcmask 130048
        %v253 = vsel %vm252, %v250, 0.0
        %254 = vadd.xlane.f32.xlu0 %v253
        %v255 = vpop.xlane.xlu0 %254
        %v256 = vadd.f32 %v251, %v255
        %vm257 = vcmask 7168
        %258 = vst.msk [vmem:[#allocation2] sm:$0xff] %vm257, %v256
      $region36: #{infonce_cosine.1} parent=27 // pred_fallthru
        _
      %p259 = pneg %p239
      // Predicated region
      $region37: #{infonce_cosine.1} parent=27 // pred_check
        _
      $region38: #{infonce_cosine.1} parent=27 // pred_check_branch
        %261 = sbr.rel (%p239) target = $region40
      $region39: #{infonce_cosine.1} parent=27 // pred_region
        %v262 = vld [vmem:[#allocation2] sm:$0xff]
        %vm263 = vcmask 130048
        %v264 = vsel %vm263, %v231, 0.0
        %265 = vadd.xlane.f32.xlu0 %v264
        %v266 = vpop.xlane.xlu0 %265
        %v267 = vadd.f32 %v262, %v266
        %vm268 = vcmask 7168
        %269 = vst.msk [vmem:[#allocation2] sm:$0xff] %vm268, %v267
      $region40: #{infonce_cosine.1} parent=27 // pred_fallthru
        _
      // Predicated region
      $region41: #{infonce_cosine.1} parent=27 // pred_check
        %p270 = pneg %p174
      $region42: #{infonce_cosine.1} parent=27 // pred_check_branch
        %272 = sbr.rel (%p270) target = $region44
      $region43: #{infonce_cosine.1} parent=27 // pred_region
        %v273 = vld [vmem:[#allocation2] sm:$0xff]
        %v274 = vlog2.pop %v273
        %v275 = vmul.f32 %v274, 0.6931472
        %v276 = vadd.f32 %v275, 2.0
        %vm277 = vcmask 7168
        %v278 = vsel %vm277, %v276, 0.0
        %279 = vadd.xlane.f32.xlu0 %v278
        %v280 = vpop.xlane.xlu0 %279
        %v281 = vrot.slane %v280, 4
        %v282 = vadd.f32 %v280, %v281
        %v283 = vrot.slane %v282, 2
        %v284 = vadd.f32 %v282, %v283
        %v285 = vrot.slane %v284, 1
        %v286 = vadd.f32 %v284, %v285
        %s287 = vtos %v286
        %v288 = vlaneseq
        %v289 = vshrl.u32 %v288, 7
        %v290 = vlaneseq
        %v291 = vand.u32 %v290, 127
        %vm292 = vcmp.eq.s32.totalorder %v289, 0
        %vm293 = vcmp.eq.s32.totalorder %v291, 0
        %vm294 = vmand %vm292, %vm293
        %v295 = vstv %s287
        %v296 = vsel %vm294, %v295, 0.0
        %297 = vst [vmem:[%s172] sm:$0xff] %v296
      $region44: #{infonce_cosine.1} parent=27 // pred_fallthru
        _
      %p298 = scmp.lt.s32.totalorder %s17, 1
      %s299 = scalar_select %p298, %s17, 1
      %s300 = smul.addr %s299, 8
      %s301 = scalar_lea.vmem %s2, %s300
      // Predicated region
      $region45: #{infonce_cosine.1} parent=27 // pred_check
        %p302 = pneg %p95
      $region46: #{infonce_cosine.1} parent=27 // pred_check_branch
        %304 = sbr.rel (%p302) target = $region48
      $region47: #{infonce_cosine.1} parent=27 // pred_region
        _
      $region48: #{infonce_cosine.1} parent=27 // pred_fallthru
        _
    $region28: #{infonce_cosine.1} parent=5 // pred_fallthru
      _
    %p305 = scmp.le.s32.totalorder 2, %s8
    // Predicated region
    $region49: #{infonce_cosine.1} parent=5 // pred_check
      %p306 = pneg %p305
    $region50: #{infonce_cosine.1} parent=5 // pred_check_branch
      %308 = sbr.rel (%p306) target = $region52
    $region51: #{infonce_cosine.1} parent=5 // pred_region
      %s309 = ssub.s32 %s8, 2
      // Predicated region
      $region53: #{infonce_cosine.1} parent=51 // pred_check
        %p310 = pneg %p101
      $region54: #{infonce_cosine.1} parent=51 // pred_check_branch
        %312 = sbr.rel (%p310) target = $region56
      $region55: #{infonce_cosine.1} parent=51 // pred_region
        %p313 = scmp.lt.s32.totalorder %s19, 1
        %s314 = scalar_select %p313, %s19, 1
        %s315 = smul.addr %s314, 8
        %s316 = scalar_lea.vmem %s2, %s315
      $region56: #{infonce_cosine.1} parent=51 // pred_fallthru
        _
    $region52: #{infonce_cosine.1} parent=5 // pred_fallthru
      _
  $region6: #{infonce_cosine.1} parent=0 // loop_footer
    %s12 = sadd.s32 1, %s8
  $region7: #{infonce_cosine.1} parent=0 // loop_footer_branch
    %7 = sbr.rel target = $region3
  $region8: #{infonce_cosine.1} parent=0 // loop_exit
    _

</llo_original>
